<compile_context>
chip_gen: v5e
topology: v5e:2x2
jax: 0.10.0
libtpu: 0.0.40
codegen_flags: <defaults>
</compile_context>

<pallas_src>
import functools
import math

import jax
import jax.numpy as jnp
from jax.experimental import pallas as pl
from jax.experimental.pallas import tpu as pltpu


_VMEM_LIMIT = 48 * 1024 * 1024   # leaves headroom under v7x's 64 MiB physical VMEM


def _pick_tile(dim, target):
    """Full dim when small; `target` when it divides evenly; else full (untiled)."""
    if dim <= target:
        return dim
    if dim % target == 0:
        return target
    return dim


# ----------------------------- Pallas kernels ------------------------------ #

def _dense_kernel(x_ref, w_ref, b_ref, o_ref, acc_ref, *, activation):
    """Tiled y = x @ W + b (+ optional GELU/tanh epilogue); f32 accumulation."""
    @pl.when(pl.program_id(2) == 0)
    def _init():
        acc_ref[...] = jnp.zeros_like(acc_ref)

    acc_ref[...] += jnp.dot(
        x_ref[...].astype(jnp.bfloat16),           # bf16 MXU operands
        w_ref[...].astype(jnp.bfloat16),
        preferred_element_type=jnp.float32)

    @pl.when(pl.program_id(2) == pl.num_programs(2) - 1)
    def _finalize():
        y = acc_ref[...] + b_ref[...]
        if activation == "gelu":
            # TODO(synk): HF BERT uses exact (erf) GELU; tanh approximation kept for a
            # Mosaic-safe EUP lowering.
            y = 0.5 * y * (1.0 + jnp.tanh(0.7978845608028654 * (y + 0.044715 * y * y * y)))
        elif activation == "tanh":
            y = jnp.tanh(y)
        o_ref[...] = y.astype(o_ref.dtype)


def _layernorm_kernel(x_ref, g_ref, b_ref, o_ref, *, eps):
    x = x_ref[...]
    mu = jnp.mean(x, axis=-1, keepdims=True)
    xc = x - mu
    var = jnp.mean(xc * xc, axis=-1, keepdims=True)
    o_ref[...] = (xc * jax.lax.rsqrt(var + eps) * g_ref[...] + b_ref[...]).astype(o_ref.dtype)


def _add_layernorm_kernel(x_ref, r_ref, g_ref, b_ref, o_ref, *, eps):
    """Fused residual add + LayerNorm: LN(x + r)."""
    x = x_ref[...] + r_ref[...]
    mu = jnp.mean(x, axis=-1, keepdims=True)
    xc = x - mu
    var = jnp.mean(xc * xc, axis=-1, keepdims=True)
    o_ref[...] = (xc * jax.lax.rsqrt(var + eps) * g_ref[...] + b_ref[...]).astype(o_ref.dtype)


def _attention_kernel(q_ref, k_ref, v_ref, bias_ref, o_ref, *, scale):
    """A block of heads: masked softmax(q k^T / sqrt(d)) v via batched einsum."""
    q = q_ref[...]                                           # (hb, S, D) bf16
    k = k_ref[...]
    v = v_ref[...]
    s = jnp.einsum("bqd,bkd->bqk", q, k,
                   preferred_element_type=jnp.float32) * scale          # (hb, S, S)
    s = s + bias_ref[...]                                    # (hb, 1, S) additive mask
    m = jnp.max(s, axis=-1, keepdims=True)
    p = jnp.exp(s - m)
    p = p * pl.reciprocal(jnp.sum(p, axis=-1, keepdims=True), approx=True)
    o = jnp.einsum("bqk,bkd->bqd", p.astype(v.dtype), v,
                   preferred_element_type=jnp.float32)
    o_ref[...] = o.astype(o_ref.dtype)


def _softmax_kernel(x_ref, o_ref):
    x = x_ref[...]
    m = jnp.max(x, axis=-1, keepdims=True)
    e = jnp.exp(x - m)
    o_ref[...] = e / jnp.sum(e, axis=-1, keepdims=True)


# ------------------------------ kernel wrappers ----------------------------- #

def dense(x, w, b, activation=None, out_dtype=jnp.float32, tm=256, tn=256, tk=512):
    M, K = x.shape
    _, N = w.shape
    tm = _pick_tile(M, tm)
    tn = _pick_tile(N, tn)
    tk = _pick_tile(K, tk)
    kernel = functools.partial(_dense_kernel, activation=activation)
    return pl.pallas_call(
        kernel,
        out_shape=jax.ShapeDtypeStruct((M, N), out_dtype),
        grid=(M // tm, N // tn, K // tk),
        in_specs=[
            pl.BlockSpec((tm, tk), lambda i, j, k: (i, k)),
            pl.BlockSpec((tk, tn), lambda i, j, k: (k, j)),
            pl.BlockSpec((1, tn), lambda i, j, k: (0, j)),
        ],
        out_specs=pl.BlockSpec((tm, tn), lambda i, j, k: (i, j)),
        scratch_shapes=[pltpu.VMEM((tm, tn), jnp.float32)],
        compiler_params=pltpu.CompilerParams(
            dimension_semantics=("parallel", "parallel", "arbitrary"),
            vmem_limit_bytes=_VMEM_LIMIT),
    )(x, w, b.reshape(1, N))


def layernorm(x, gamma, beta, eps=1e-12, tm=256):
    M, H = x.shape
    tm = _pick_tile(M, tm)
    kernel = functools.partial(_layernorm_kernel, eps=eps)
    return pl.pallas_call(
        kernel,
        out_shape=jax.ShapeDtypeStruct((M, H), jnp.float32),
        grid=(M // tm,),
        in_specs=[
            pl.BlockSpec((tm, H), lambda i: (i, 0)),
            pl.BlockSpec((1, H), lambda i: (0, 0)),
            pl.BlockSpec((1, H), lambda i: (0, 0)),
        ],
        out_specs=pl.BlockSpec((tm, H), lambda i: (i, 0)),
        compiler_params=pltpu.CompilerParams(
            dimension_semantics=("parallel",), vmem_limit_bytes=_VMEM_LIMIT),
    )(x, gamma.reshape(1, H), beta.reshape(1, H))


def add_layernorm(x, resid, gamma, beta, eps=1e-12, tm=256):
    M, H = x.shape
    tm = _pick_tile(M, tm)
    kernel = functools.partial(_add_layernorm_kernel, eps=eps)
    return pl.pallas_call(
        kernel,
        out_shape=jax.ShapeDtypeStruct((M, H), jnp.float32),
        grid=(M // tm,),
        in_specs=[
            pl.BlockSpec((tm, H), lambda i: (i, 0)),
            pl.BlockSpec((tm, H), lambda i: (i, 0)),
            pl.BlockSpec((1, H), lambda i: (0, 0)),
            pl.BlockSpec((1, H), lambda i: (0, 0)),
        ],
        out_specs=pl.BlockSpec((tm, H), lambda i: (i, 0)),
        compiler_params=pltpu.CompilerParams(
            dimension_semantics=("parallel",), vmem_limit_bytes=_VMEM_LIMIT),
    )(x, resid, gamma.reshape(1, H), beta.reshape(1, H))


def multi_head_attention(q, k, v, bias, heads_per_block=8):
    """q,k,v: (B*H, S, D) bf16; bias: (B*H, 1, S) additive mask (f32)."""
    BH, S, D = q.shape
    hb = min(BH, heads_per_block)
    while BH % hb:
        hb -= 1
    kernel = functools.partial(_attention_kernel, scale=1.0 / math.sqrt(D))
    return pl.pallas_call(
        kernel,
        out_shape=jax.ShapeDtypeStruct((BH, S, D), jnp.bfloat16),
        grid=(BH // hb,),
        in_specs=[
            pl.BlockSpec((hb, S, D), lambda i: (i, 0, 0)),
            pl.BlockSpec((hb, S, D), lambda i: (i, 0, 0)),
            pl.BlockSpec((hb, S, D), lambda i: (i, 0, 0)),
            pl.BlockSpec((hb, 1, S), lambda i: (i, 0, 0)),
        ],
        out_specs=pl.BlockSpec((hb, S, D), lambda i: (i, 0, 0)),
        compiler_params=pltpu.CompilerParams(
            dimension_semantics=("parallel",), vmem_limit_bytes=_VMEM_LIMIT),
    )(q, k, v, bias)


def softmax_rows(x, tm=256):
    M, N = x.shape
    tm = _pick_tile(M, tm)
    return pl.pallas_call(
        _softmax_kernel,
        out_shape=jax.ShapeDtypeStruct((M, N), jnp.float32),
        grid=(M // tm,),
        in_specs=[pl.BlockSpec((tm, N), lambda i: (i, 0))],
        out_specs=pl.BlockSpec((tm, N), lambda i: (i, 0)),
        compiler_params=pltpu.CompilerParams(
            dimension_semantics=("parallel",), vmem_limit_bytes=_VMEM_LIMIT),
    )(x)


# ------------------------------ parameter init ------------------------------ #

def init_params(key, cfg):
    H, I = cfg["hidden"], cfg["intermediate"]
    keys = iter(jax.random.split(key, 16 + 8 * cfg["layers"]))

    def w(shape, dtype=jnp.bfloat16):
        return (jax.random.normal(next(keys), shape, jnp.float32) * 0.02).astype(dtype)

    params = {
        "word_emb": w((cfg["vocab"], H), jnp.float32),
        "pos_emb": w((cfg["max_pos"], H), jnp.float32),
        "type_emb": w((cfg["type_vocab"], H), jnp.float32),
        "emb_ln_g": jnp.ones((H,), jnp.float32),
        "emb_ln_b": jnp.zeros((H,), jnp.float32),
        "pool_w": w((H, H)),
        "pool_b": jnp.zeros((H,), jnp.float32),
        "cls_w": w((H, cfg["num_labels"])),
        "cls_b": jnp.zeros((cfg["num_labels"],), jnp.float32),
        "layers": [],
    }
    for _ in range(cfg["layers"]):
        params["layers"].append({
            "wqkv": w((H, 3 * H)), "bqkv": jnp.zeros((3 * H,), jnp.float32),   # fused Q/K/V
            "wo": w((H, H)), "bo": jnp.zeros((H,), jnp.float32),
            "ln1_g": jnp.ones((H,), jnp.float32), "ln1_b": jnp.zeros((H,), jnp.float32),
            "w1": w((H, I)), "b1": jnp.zeros((I,), jnp.float32),
            "w2": w((I, H)), "b2": jnp.zeros((H,), jnp.float32),
            "ln2_g": jnp.ones((H,), jnp.float32), "ln2_b": jnp.zeros((H,), jnp.float32),
        })
    return params


# ------------------------------- forward pass ------------------------------- #

def bert_multiclass_forward(params, cfg, input_ids, attention_mask,
                            token_type_ids, labels=None):
    """Mirrors BertMultiClass.forward: returns (loss_or_None, softmax(logits))."""
    B, S = input_ids.shape
    H, nH = cfg["hidden"], cfg["heads"]
    dH = H // nH

    # --- embeddings (gather = glue) + LayerNorm kernel ---
    pos_ids = jnp.arange(S, dtype=jnp.int32)[None, :]
    x = (params["word_emb"][input_ids]
         + params["pos_emb"][pos_ids]
         + params["type_emb"][token_type_ids])
    x = x.reshape(B * S, H).astype(jnp.float32)
    x = layernorm(x, params["emb_ln_g"], params["emb_ln_b"])

    # additive attention mask, one row per (batch, head)
    bias = (1.0 - attention_mask.astype(jnp.float32)) * -1e9            # (B, S)
    bias = jnp.broadcast_to(bias[:, None, None, :], (B, nH, 1, S)).reshape(B * nH, 1, S)

    def split_heads(t):
        # TODO(synk): head split/merge transposes stay in XLA glue; expressing them
        # via attention-BlockSpec indexing needs a lane-dense (128-wide) head layout.
        return t.reshape(B, S, nH, dH).transpose(0, 2, 1, 3).reshape(B * nH, S, dH)

    for layer in params["layers"]:
        # fused Q/K/V projection: x read once, single wide GEMM
        qkv = dense(x, layer["wqkv"], layer["bqkv"], out_dtype=jnp.bfloat16)
        q, k, v = qkv[:, :H], qkv[:, H:2 * H], qkv[:, 2 * H:]
        ctx = multi_head_attention(split_heads(q), split_heads(k), split_heads(v), bias)
        ctx = ctx.reshape(B, nH, S, dH).transpose(0, 2, 1, 3).reshape(B * S, H)
        attn_out = dense(ctx, layer["wo"], layer["bo"])
        x = add_layernorm(x, attn_out, layer["ln1_g"], layer["ln1_b"])
        ff = dense(x, layer["w1"], layer["b1"], activation="gelu", out_dtype=jnp.bfloat16)
        ff = dense(ff, layer["w2"], layer["b2"])
        x = add_layernorm(x, ff, layer["ln2_g"], layer["ln2_b"])

    # --- pooler (CLS token -> dense+tanh) and classifier head ---
    cls = x.reshape(B, S, H)[:, 0, :]
    pooled = dense(cls, params["pool_w"], params["pool_b"], activation="tanh")
    logits = dense(pooled, params["cls_w"], params["cls_b"])             # (B, num_labels)

    probas = softmax_rows(logits)                                        # nn.Softmax(dim=1)

    loss = None
    if labels is not None:
        # CrossEntropyLoss(pred.logits, labels.view(-1)) — scalar reduction as glue
        logp = jax.nn.log_softmax(logits, axis=-1)
        picked = jnp.take_along_axis(logp, labels.reshape(-1, 1).astype(jnp.int32), axis=1)
        loss = -jnp.mean(picked)
    return loss, probas


# ----------------------------------- main ----------------------------------- #

if __name__ == "__main__":
    cfg = dict(vocab=64, hidden=32, heads=2, layers=2, intermediate=64,
               max_pos=16, type_vocab=2, num_labels=4)
    B, S = 2, 8

    key = jax.random.PRNGKey(0)
    k_param, k_ids, k_lbl = jax.random.split(key, 3)

    params = init_params(k_param, cfg)
    input_ids = jax.random.randint(k_ids, (B, S), 0, cfg["vocab"], dtype=jnp.int32)
    attention_mask = jnp.ones((B, S), dtype=jnp.int32)
    token_type_ids = jnp.zeros((B, S), dtype=jnp.int32)
    labels = jax.random.randint(k_lbl, (B,), 0, cfg["num_labels"], dtype=jnp.int32)

    loss, probas = bert_multiclass_forward(params, cfg, input_ids, attention_mask,
                                           token_type_ids, labels=labels)
    jax.block_until_ready(probas)
    jax.block_until_ready(loss)
    assert probas.shape == (B, cfg["num_labels"])
    assert bool(jnp.all(jnp.isfinite(probas))) and bool(jnp.isfinite(loss))
    print("KERNEL_OK")
</pallas_src>

<mosaic_0001>
module attributes {stable_mosaic.version = 11 : i64} {
  func.func @_layernorm_kernel(%arg0: i32, %arg1: memref<16x32xf32, #tpu.memory_space<vmem>>, %arg2: memref<1x32xf32, #tpu.memory_space<vmem>>, %arg3: memref<1x32xf32, #tpu.memory_space<vmem>>, %arg4: memref<16x32xf32, #tpu.memory_space<vmem>>) attributes {dimension_semantics = [#tpu.dimension_semantics<parallel>], iteration_bounds = array<i64: 1>, scalar_prefetch = 0 : i64, scratch_operands = 0 : i64, tpu.core_type = #tpu.core_type<tc>, window_params = [{transform_indices = @transform_0, window_bounds = array<i64: 16, 32>}, {pipeline_mode = #tpu.pipeline_mode<synchronous>, transform_indices = @transform_1, window_bounds = array<i64: 1, 32>}, {pipeline_mode = #tpu.pipeline_mode<synchronous>, transform_indices = @transform_2, window_bounds = array<i64: 1, 32>}, {transform_indices = @transform_3, window_bounds = array<i64: 16, 32>}]} {
    %c0 = arith.constant 0 : index
    %c0_0 = arith.constant 0 : index
    %0 = vector.load %arg1[%c0, %c0_0] : memref<16x32xf32, #tpu.memory_space<vmem>>, vector<16x32xf32>
    %cst = arith.constant dense<0.000000e+00> : vector<16xf32>
    %1 = vector.multi_reduction <add>, %0, %cst [1] : vector<16x32xf32> to vector<16xf32>
    %2 = vector.shape_cast %1 : vector<16xf32> to vector<16x1xf32>
    %cst_1 = arith.constant 3.200000e+01 : f32
    %3 = vector.broadcast %cst_1 : f32 to vector<16x1xf32>
    %4 = arith.divf %2, %3 : vector<16x1xf32>
    %5 = vector.broadcast %4 : vector<16x1xf32> to vector<16x32xf32>
    %6 = arith.subf %0, %5 : vector<16x32xf32>
    %7 = arith.mulf %6, %6 : vector<16x32xf32>
    %cst_2 = arith.constant dense<0.000000e+00> : vector<16xf32>
    %8 = vector.multi_reduction <add>, %7, %cst_2 [1] : vector<16x32xf32> to vector<16xf32>
    %9 = vector.shape_cast %8 : vector<16xf32> to vector<16x1xf32>
    %cst_3 = arith.constant 3.200000e+01 : f32
    %10 = vector.broadcast %cst_3 : f32 to vector<16x1xf32>
    %11 = arith.divf %9, %10 : vector<16x1xf32>
    %cst_4 = arith.constant 9.99999996E-13 : f32
    %12 = vector.broadcast %cst_4 : f32 to vector<16x1xf32>
    %13 = arith.addf %11, %12 : vector<16x1xf32>
    %14 = math.rsqrt %13 : vector<16x1xf32>
    %15 = vector.broadcast %14 : vector<16x1xf32> to vector<16x32xf32>
    %16 = arith.mulf %6, %15 : vector<16x32xf32>
    %c0_5 = arith.constant 0 : index
    %c0_6 = arith.constant 0 : index
    %17 = vector.load %arg2[%c0_5, %c0_6] : memref<1x32xf32, #tpu.memory_space<vmem>>, vector<1x32xf32>
    %18 = vector.broadcast %17 : vector<1x32xf32> to vector<16x32xf32>
    %19 = arith.mulf %16, %18 : vector<16x32xf32>
    %c0_7 = arith.constant 0 : index
    %c0_8 = arith.constant 0 : index
    %20 = vector.load %arg3[%c0_7, %c0_8] : memref<1x32xf32, #tpu.memory_space<vmem>>, vector<1x32xf32>
    %21 = vector.broadcast %20 : vector<1x32xf32> to vector<16x32xf32>
    %22 = arith.addf %19, %21 : vector<16x32xf32>
    %c0_9 = arith.constant 0 : index
    %c0_10 = arith.constant 0 : index
    %23 = vector.load %arg4[%c0_9, %c0_10] : memref<16x32xf32, #tpu.memory_space<vmem>>, vector<16x32xf32>
    tpu.vector_store %arg4[%c0_9, %c0_10], %22 {strides = array<i32>} : memref<16x32xf32, #tpu.memory_space<vmem>>, vector<16x32xf32>,
    return
  }
  func.func @transform_0(%arg0: i32) -> (i32, i32) {
    %c0_i32 = arith.constant 0 : i32
    %c0_i32_0 = arith.constant 0 : i32
    return %arg0, %c0_i32 : i32, i32
  }
  func.func @transform_1(%arg0: i32) -> (i32, i32) {
    %c0_i32 = arith.constant 0 : i32
    %c0_i32_0 = arith.constant 0 : i32
    %c0_i32_1 = arith.constant 0 : i32
    return %c0_i32, %c0_i32_0 : i32, i32
  }
  func.func @transform_2(%arg0: i32) -> (i32, i32) {
    %c0_i32 = arith.constant 0 : i32
    %c0_i32_0 = arith.constant 0 : i32
    %c0_i32_1 = arith.constant 0 : i32
    return %c0_i32, %c0_i32_0 : i32, i32
  }
  func.func @transform_3(%arg0: i32) -> (i32, i32) {
    %c0_i32 = arith.constant 0 : i32
    %c0_i32_0 = arith.constant 0 : i32
    return %arg0, %c0_i32 : i32, i32
  }
}

</mosaic_0001>

<llo_original>
// kernel: tpu_custom_call.1
$region0: #{tpu_custom_call.1}
  #allocation0 [shape = 'u32[]', space=smem, size = 0x4, offset = 0x4, fixed_abs, tag = 'smem constant byte address 0x4 - core index']
  #allocation1 [shape = 'u32[72,128]{1,0:T(1,128)}', space=vmem, size = 0x9000, scoped, tag = 'internal scratch']
  %s0 = inlined_call_operand.hbm [shape: f32[16,32], index: 0, kind: input, shape index: {}]
  %s1 = inlined_call_operand.hbm [shape: f32[1,32], index: 1, kind: input, shape index: {}]
  %s2 = inlined_call_operand.vmem [shape: f32[1,32], index: 2, kind: input, shape index: {}]
  %s3 = inlined_call_operand.hbm [shape: f32[16,32], index: 3, kind: output, shape index: {}]
  %s4 = sld [smem:[#allocation0]]
  $region30: #{tpu_custom_call.1} parent=0
    _
  %s6 = ssub.s32 1, %s4
  %s7 = scalar_select 0, %s6, %s4
  $region1: #{tpu_custom_call.1} parent=0
    #allocation2 [shape = 'u8[8192]{0}', space=vmem, size = 0x2000, scoped, tag = 'input window, operand 0, single buffered']
    #allocation3 [shape = 's32[1]{0}', space=sflag, size = 0x4, scoped, tag = 'scoped memory for tpu_custom_call.1']
    #allocation4 [shape = 's32[1]{0}', space=sflag, size = 0x4, scoped, tag = 'scoped memory for tpu_custom_call.1']
    #allocation5 [shape = 'u8[512]{0}', space=vmem, size = 0x400, scoped, tag = 'input window, operand 1, single buffered']
    #allocation6 [shape = 's32[1]{0}', space=sflag, size = 0x4, scoped, tag = 'scoped memory for tpu_custom_call.1']
    #allocation7 [shape = 'u8[8192]{0}', space=vmem, size = 0x2000, scoped, tag = 'output window, operand 0, single buffered']
    %8 = vsyncpa [#allocation3], 0
    %9 = vsyncpa [#allocation6], 0
    %10 = vsyncpa [#allocation4], 0
    // Predicated region
    $region2: #{tpu_custom_call.1} parent=1 // pred_check
      _
    $region3: #{tpu_custom_call.1} parent=1 // pred_check_branch
      %12 = sbr.rel (0) target = $region5
    $region4: #{tpu_custom_call.1} parent=1 // pred_region
      %14 = vsyncadd [#allocation3], 0
      %s15 = sshll.u32 %s0, 4
      %s16 = int_to_ptr.hbm [resolvable:$true] %s15
      %s17 = sshll.u32 [#allocation2], 4
      %s18 = int_to_ptr.vmem [resolvable:$true] %s17
      %23 = dma.hbm_to_vmem [thread:$0]  %s16, 256, %s18, [#allocation3], 128, 128, 8
    $region5: #{tpu_custom_call.1} parent=1 // pred_fallthru
      _
    // Predicated region
    $region6: #{tpu_custom_call.1} parent=1 // pred_check
      _
    $region7: #{tpu_custom_call.1} parent=1 // pred_check_branch
      %25 = sbr.rel (0) target = $region9
    $region8: #{tpu_custom_call.1} parent=1 // pred_region
      %27 = vsyncadd [#allocation6], 0
      %s29 = sshll.u32 %s1, 4
      %s30 = int_to_ptr.hbm [resolvable:$true] %s29
      %s31 = sshll.u32 [#allocation5], 4
      %s32 = int_to_ptr.vmem [resolvable:$true] %s31
      %34 = dma.hbm_to_vmem [thread:$0]  %s30, 16, %s32, [#allocation6]
    $region9: #{tpu_custom_call.1} parent=1 // pred_fallthru
      _
    // Predicated region
    $region10: #{tpu_custom_call.1} parent=1 // pred_check
      _
    $region11: #{tpu_custom_call.1} parent=1 // pred_check_branch
      %36 = sbr.rel (0) target = $region13
    $region12: #{tpu_custom_call.1} parent=1 // pred_region
      _
    $region13: #{tpu_custom_call.1} parent=1 // pred_fallthru
      _
    // Predicated region
    $region14: #{tpu_custom_call.1} parent=1 // pred_check
      _
    $region15: #{tpu_custom_call.1} parent=1 // pred_check_branch
      %38 = sbr.rel (0) target = $region17
    $region16: #{tpu_custom_call.1} parent=1 // pred_region
      %40 = dma.done [#allocation3], 256
    $region17: #{tpu_custom_call.1} parent=1 // pred_fallthru
      _
    // Predicated region
    $region18: #{tpu_custom_call.1} parent=1 // pred_check
      _
    $region19: #{tpu_custom_call.1} parent=1 // pred_check_branch
      %42 = sbr.rel (0) target = $region21
    $region20: #{tpu_custom_call.1} parent=1 // pred_region
      %44 = dma.done [#allocation6], 16
    $region21: #{tpu_custom_call.1} parent=1 // pred_fallthru
      _
    %v45 = vld [vmem:[#allocation2] sm:$0xff]
    %v46 = vld [vmem:[#allocation2 + $0x8] sm:$0xff]
    %vm47 = vcmask 261120
    %v48 = vsel %vm47, %v45, 0.0
    %49 = vadd.xlane.f32.xlu0 %v48
    %v50 = vpop.xlane.xlu0 %49
    %v51 = vsel %vm47, %v46, 0.0
    %52 = vadd.xlane.f32.xlu0 %v51
    %v53 = vpop.xlane.xlu0 %52
    %v54 = vrcp.pop 32.0
    %v55 = vmul.f32 32.0, %v54
    %v56 = vsub.f32 1.0, %v55
    %v57 = vmul.f32 %v54, %v56
    %v58 = vadd.f32 %v54, %v57
    %vm59 = vweird.f32 %v54
    %v60 = vsel %vm59, %v54, %v58
    %v61 = vmul.f32 %v50, %v60
    %v62 = vmul.f32 %v53, %v60
    %v63 = vsub.f32 %v45, %v61
    %v64 = vsub.f32 %v46, %v62
    %v65 = vmul.f32 %v63, %v63
    %v66 = vmul.f32 %v64, %v64
    %v67 = vsel %vm47, %v65, 0.0
    %68 = vadd.xlane.f32.xlu0 %v67
    %v69 = vpop.xlane.xlu0 %68
    %v70 = vsel %vm47, %v66, 0.0
    %71 = vadd.xlane.f32.xlu0 %v70
    %v72 = vpop.xlane.xlu0 %71
    %v73 = vmul.f32 %v69, %v60
    %v74 = vmul.f32 %v72, %v60
    %v75 = vadd.f32 %v73, 1e-12
    %v76 = vadd.f32 %v74, 1e-12
    %v77 = vrsqrt.pop %v75
    %v78 = vmul.f32 %v77, %v75
    %v79 = vmul.f32 %v78, %v77
    %v80 = vmul.f32 0.5, %v79
    %v81 = vsub.f32 1.5, %v80
    %v82 = vmul.f32 %v77, %v81
    %vm83 = vweird.f32 %v75
    %vm84 = vweird.f32 %v77
    %vm85 = vmor %vm83, %vm84
    %v86 = vsel %vm85, %v77, %v82
    %v87 = vrsqrt.pop %v76
    %v88 = vmul.f32 %v87, %v76
    %v89 = vmul.f32 %v88, %v87
    %v90 = vmul.f32 0.5, %v89
    %v91 = vsub.f32 1.5, %v90
    %v92 = vmul.f32 %v87, %v91
    %vm93 = vweird.f32 %v76
    %vm94 = vweird.f32 %v87
    %vm95 = vmor %vm93, %vm94
    %v96 = vsel %vm95, %v87, %v92
    %v97 = vmul.f32 %v63, %v86
    %v98 = vmul.f32 %v64, %v96
    %v99 = vld [vmem:[#allocation5] sm:$0x1]
    %v101 = vperm.slane %v99, 0
    %v103 = vmul.f32 %v97, %v101
    %v104 = vmul.f32 %v98, %v101
    %v105 = vld [vmem:[%s2] sm:$0x1]
    %v107 = vperm.slane %v105, 0
    %v109 = vadd.f32 %v103, %v107
    %v110 = vadd.f32 %v104, %v107
    %111 = vst.msk [vmem:[#allocation7] sm:$0xff] %vm47, %v109
    %112 = vst.msk [vmem:[#allocation7 + $0x8] sm:$0xff] %vm47, %v110
    // Predicated region
    $region22: #{tpu_custom_call.1} parent=1 // pred_check
      _
    $region23: #{tpu_custom_call.1} parent=1 // pred_check_branch
      %114 = sbr.rel (0) target = $region25
    $region24: #{tpu_custom_call.1} parent=1 // pred_region
      %116 = vsyncadd [#allocation4], 0
      %s117 = sshll.u32 [#allocation7], 4
      %s118 = int_to_ptr.vmem [resolvable:$true] %s117
      %s119 = sshll.u32 %s3, 4
      %s120 = int_to_ptr.hbm [resolvable:$true] %s119
      %125 = dma.vmem_to_hbm [thread:$0]  %s118, 256, %s120, [#allocation4], 128, 128, 8
    $region25: #{tpu_custom_call.1} parent=1 // pred_fallthru
      _
    // Predicated region
    $region26: #{tpu_custom_call.1} parent=1 // pred_check
      _
    $region27: #{tpu_custom_call.1} parent=1 // pred_check_branch
      %127 = sbr.rel (0) target = $region29
    $region28: #{tpu_custom_call.1} parent=1 // pred_region
      %129 = dma.done [#allocation4], 256
    $region29: #{tpu_custom_call.1} parent=1 // pred_fallthru
      _
    %130 = vsyncpa [#allocation3], 1
    %131 = vsyncpa [#allocation6], 1
    %132 = vsyncpa [#allocation4], 1

</llo_original>
